<compile_context>
chip_gen: v7x
topology: tpu7x:2x2x1
jax: 0.10.0
libtpu: 0.0.40
codegen_flags: <defaults>
</compile_context>

<pallas_src>
import functools

import jax
import jax.numpy as jnp
from jax.experimental import pallas as pl
from jax.experimental.pallas import tpu as pltpu

EPS = 1e-5
NEG_SLOPE = 0.01


def _double_conv_kernel(x_ref, w1_ref, w2_ref, g1_ref, b1_ref, g2_ref, b2_ref,
                        q_ref, o_ref, *, h, inv_count):
    # x_ref : (N*H, W*Cin)         lane-dense input rows (NHWC row-major)
    # w1_ref: (3, W*Cin,  W*Cout)  banded conv1 weights, one slab per kh tap
    # w2_ref: (3, W*Cout, W*Cout)  banded conv2 weights
    # g*/b* : (1, W*Cout)          per-channel BN affine params tiled over W
    # q_ref : (W*Cout, W*Cout)     channel-sum + broadcast matrix kron(1_WxW, I_Cout)
    # o_ref : (N*H, W*Cout)        lane-dense output rows
    nh = x_ref.shape[0]

    # Per-image H-boundary masks: (N*H, 1) columns computed once, lane-broadcast
    # is free, reused by both convs.
    r = jax.lax.broadcasted_iota(jnp.int32, (nh, 1), 0) % h
    top = r == 0          # rows with no row above inside the same image
    bot = r == (h - 1)    # rows with no row below inside the same image

    def conv_rows(y, w_ref):
        # Circular sublane rotation (XLU slot) + boundary mask: the wrap-around
        # rows are exactly the masked ones, so the circular roll is safe.
        down = jnp.where(top, 0.0, pltpu.roll(y, 1, axis=0))        # y[r-1]
        up = jnp.where(bot, 0.0, pltpu.roll(y, nh - 1, axis=0))     # y[r+1]
        # Three accumulating MXU matmuls, one per kh tap; kw taps + W padding
        # are folded into the banded weights.  No relayout needed.
        acc = jnp.dot(down, w_ref[0], preferred_element_type=jnp.float32)
        acc = acc + jnp.dot(y, w_ref[1], preferred_element_type=jnp.float32)
        acc = acc + jnp.dot(up, w_ref[2], preferred_element_type=jnp.float32)
        return acc

    def bn_lrelu(acc, g_ref, b_ref):
        # Training-mode BatchNorm with batch statistics (biased variance).
        s = jnp.sum(acc, axis=0, keepdims=True)                 # (1, W*Cout)
        sq = jnp.sum(acc * acc, axis=0, keepdims=True)          # (1, W*Cout)
        # Sum the W lane-groups per channel and broadcast back in one matmul.
        red = jnp.dot(jnp.concatenate([s, sq], axis=0), q_ref[...],
                      preferred_element_type=jnp.float32)       # (2, W*Cout)
        mean = red[0:1] * inv_count
        var = red[1:2] * inv_count - mean * mean                 # biased variance
        scale = jax.lax.rsqrt(var + EPS) * g_ref[...]
        shift = b_ref[...] - mean * scale
        z = acc * scale + shift
        return jnp.maximum(z, NEG_SLOPE * z)                     # LeakyReLU(0.01)

    y1 = bn_lrelu(conv_rows(x_ref[...], w1_ref), g1_ref, b1_ref)   # (N*H, W*Cout)
    y2 = bn_lrelu(conv_rows(y1, w2_ref), g2_ref, b2_ref)           # (N*H, W*Cout)
    o_ref[...] = y2.astype(o_ref.dtype)


def _conv_tap_weights(w, width):
    """OIHW (Cout, Cin, 3, 3) -> (3, W*Cin, W*Cout) banded row-conv matrices.

    taps[kh][w_in*Cin + ci, w_out*Cout + co] = w[co, ci, kh, w_in - w_out + 1]
    (zero outside the 3-wide band); the band encodes the W-direction zero padding.
    """
    cout, cin = w.shape[0], w.shape[1]
    w = w.astype(jnp.float32)
    taps = []
    for kh in range(3):
        a = jnp.zeros((width * cin, width * cout), jnp.float32)
        for kw in range(3):
            sel = jnp.eye(width, width, k=1 - kw, dtype=jnp.float32)  # w_out = w_in + 1 - kw
            a = a + jnp.kron(sel, w[:, :, kh, kw].T)
        taps.append(a)
    return jnp.stack(taps, axis=0)


def prepare_params(w1, g1, b1, w2, g2, b2, width):
    """One-time (per parameter change) packing; keep OUT of the per-call path."""
    cout = w1.shape[0]
    w1_t = _conv_tap_weights(w1, width)                      # (3, W*Cin,  W*Cout)
    w2_t = _conv_tap_weights(w2, width)                      # (3, W*Cout, W*Cout)
    q = jnp.kron(jnp.ones((width, width), jnp.float32),
                 jnp.eye(cout, dtype=jnp.float32))           # (W*Cout, W*Cout)
    tile = lambda v: jnp.tile(v.reshape(1, cout).astype(jnp.float32), (1, width))
    return w1_t, w2_t, tile(g1), tile(b1), tile(g2), tile(b2), q


@jax.jit
def double_convolutional(x, w1_t, w2_t, g1_l, b1_l, g2_l, b2_l, q):
    """x: (N, Cin, H, W) NCHW (PyTorch convention).  Returns (N, Cout, H, W)."""
    n, cin, h, w = x.shape
    cout = q.shape[0] // w
    wci, wco = w * cin, w * cout

    # NCHW -> lane-dense rows.  TODO(synk): if adjacent layers adopt the
    # (N*H, W*C) layout these per-call relayouts disappear entirely.
    x_rows = jnp.transpose(x, (0, 2, 3, 1)).reshape(n * h, wci).astype(jnp.float32)

    kernel = functools.partial(_double_conv_kernel, h=h,
                               inv_count=1.0 / float(n * h * w))
    vmem = pl.BlockSpec(memory_space=pltpu.MemorySpace.VMEM)

    out_rows = pl.pallas_call(
        kernel,
        out_shape=jax.ShapeDtypeStruct((n * h, wco), jnp.float32),
        in_specs=[vmem] * 8,
        out_specs=vmem,
        compiler_params=pltpu.CompilerParams(vmem_limit_bytes=32 * 1024 * 1024),
    )(x_rows, w1_t, w2_t, g1_l, b1_l, g2_l, b2_l, q)

    # (N*H, W*Cout) -> NCHW
    return jnp.transpose(out_rows.reshape(n, h, w, cout), (0, 3, 1, 2))


# ---------------- pure-JAX reference (for correctness check) ----------------
def _reference(x, w1, g1, b1, w2, g2, b2):
    def conv(y, wt):
        return jax.lax.conv_general_dilated(
            y, wt, window_strides=(1, 1), padding=((1, 1), (1, 1)),
            dimension_numbers=('NCHW', 'OIHW', 'NCHW'))

    def bn(y, g, b):
        mean = jnp.mean(y, axis=(0, 2, 3), keepdims=True)
        var = jnp.mean((y - mean) ** 2, axis=(0, 2, 3), keepdims=True)
        return ((y - mean) * jax.lax.rsqrt(var + EPS)
                * g.reshape(1, -1, 1, 1) + b.reshape(1, -1, 1, 1))

    def lrelu(y):
        return jnp.where(y > 0, y, NEG_SLOPE * y)

    y = lrelu(bn(conv(x, w1), g1, b1))
    y = lrelu(bn(conv(y, w2), g2, b2))
    return y


if __name__ == "__main__":
    N, Cin, Cout, H, W = 2, 4, 8, 16, 16

    key = jax.random.PRNGKey(0)
    kx, k1, k2 = jax.random.split(key, 3)
    x = jax.random.normal(kx, (N, Cin, H, W), dtype=jnp.float32)

    # Conv weights (kaiming-ish scale); BN params at PyTorch init (gamma=1, beta=0).
    w1 = jax.random.normal(k1, (Cout, Cin, 3, 3), dtype=jnp.float32) * 0.1
    w2 = jax.random.normal(k2, (Cout, Cout, 3, 3), dtype=jnp.float32) * 0.1
    g1 = jnp.ones((Cout,), jnp.float32)
    b1 = jnp.zeros((Cout,), jnp.float32)
    g2 = jnp.ones((Cout,), jnp.float32)
    b2 = jnp.zeros((Cout,), jnp.float32)

    params = prepare_params(w1, g1, b1, w2, g2, b2, W)   # hoisted out of the forward
    out = jax.block_until_ready(double_convolutional(x, *params))
    ref = jax.block_until_ready(_reference(x, w1, g1, b1, w2, g2, b2))

    assert out.shape == (N, Cout, H, W), out.shape
    assert jnp.allclose(out, ref, rtol=1e-4, atol=1e-4), \
        float(jnp.max(jnp.abs(out - ref)))

    print("KERNEL_OK")
</pallas_src>

<mosaic_0001>
module attributes {stable_mosaic.version = 11 : i64} {
  func.func @_double_conv_kernel(%arg0: memref<32x64xf32, #tpu.memory_space<vmem>>, %arg1: memref<3x64x128xf32, #tpu.memory_space<vmem>>, %arg2: memref<3x128x128xf32, #tpu.memory_space<vmem>>, %arg3: memref<1x128xf32, #tpu.memory_space<vmem>>, %arg4: memref<1x128xf32, #tpu.memory_space<vmem>>, %arg5: memref<1x128xf32, #tpu.memory_space<vmem>>, %arg6: memref<1x128xf32, #tpu.memory_space<vmem>>, %arg7: memref<128x128xf32, #tpu.memory_space<vmem>>, %arg8: memref<32x128xf32, #tpu.memory_space<vmem>>) attributes {dimension_semantics = [], scalar_prefetch = 0 : i64, scratch_operands = 0 : i64, tpu.core_type = #tpu.core_type<tc>} {
    %0 = tpu.iota {dimensions = array<i32: 0>} : vector<32x1xi32>
    %c16_i32 = arith.constant 16 : i32
    %c0_i32 = arith.constant 0 : i32
    %1 = arith.cmpi eq, %c16_i32, %c0_i32 : i32
    %c1_i32 = arith.constant 1 : i32
    %2 = arith.select %1, %c1_i32, %c16_i32 : i32
    %3 = vector.broadcast %2 : i32 to vector<32x1xi32>
    %4 = arith.remsi %0, %3 : vector<32x1xi32>
    %c0_i32_0 = arith.constant 0 : i32
    %5 = vector.broadcast %c0_i32_0 : i32 to vector<32x1xi32>
    %6 = arith.cmpi ne, %4, %5 : vector<32x1xi32>
    %c0_i32_1 = arith.constant 0 : i32
    %7 = vector.broadcast %c0_i32_1 : i32 to vector<32x1xi32>
    %8 = arith.cmpi slt, %4, %7 : vector<32x1xi32>
    %c0_i32_2 = arith.constant 0 : i32
    %9 = arith.cmpi slt, %2, %c0_i32_2 : i32
    %10 = vector.broadcast %9 : i1 to vector<32x1xi1>
    %11 = vector.broadcast %10 : vector<32x1xi1> to vector<32x1xi1>
    %12 = arith.xori %8, %11 : vector<32x1xi1>
    %13 = arith.andi %12, %6 : vector<32x1xi1>
    %14 = vector.broadcast %2 : i32 to vector<32x1xi32>
    %15 = arith.addi %4, %14 : vector<32x1xi32>
    %16 = arith.select %13, %15, %4 : vector<32x1xi1>, vector<32x1xi32>
    %c0_i32_3 = arith.constant 0 : i32
    %17 = vector.broadcast %c0_i32_3 : i32 to vector<32x1xi32>
    %18 = arith.cmpi eq, %16, %17 : vector<32x1xi32>
    %c15_i32 = arith.constant 15 : i32
    %19 = vector.broadcast %c15_i32 : i32 to vector<32x1xi32>
    %20 = arith.cmpi eq, %16, %19 : vector<32x1xi32>
    %c0 = arith.constant 0 : index
    %c0_4 = arith.constant 0 : index
    %21 = vector.load %arg0[%c0, %c0_4] : memref<32x64xf32, #tpu.memory_space<vmem>>, vector<32x64xf32>
    %c1_i32_5 = arith.constant 1 : i32
    %22 = tpu.dynamic_rotate %21 by %c1_i32_5 dim 0 : vector<32x64xf32>, i32 -> vector<32x64xf32>
    %cst = arith.constant 0.000000e+00 : f32
    %23 = vector.shape_cast %18 : vector<32x1xi1> to vector<32x1xi1>
    %24 = vector.broadcast %23 : vector<32x1xi1> to vector<32x64xi1>
    %25 = vector.broadcast %cst : f32 to vector<32x64xf32>
    %26 = arith.select %24, %25, %22 : vector<32x64xi1>, vector<32x64xf32>
    %c31_i32 = arith.constant 31 : i32
    %27 = tpu.dynamic_rotate %21 by %c31_i32 dim 0 : vector<32x64xf32>, i32 -> vector<32x64xf32>
    %cst_6 = arith.constant 0.000000e+00 : f32
    %28 = vector.shape_cast %20 : vector<32x1xi1> to vector<32x1xi1>
    %29 = vector.broadcast %28 : vector<32x1xi1> to vector<32x64xi1>
    %30 = vector.broadcast %cst_6 : f32 to vector<32x64xf32>
    %31 = arith.select %29, %30, %27 : vector<32x64xi1>, vector<32x64xf32>
    %c0_7 = arith.constant 0 : index
    %c0_8 = arith.constant 0 : index
    %c0_9 = arith.constant 0 : index
    %32 = vector.load %arg1[%c0_7, %c0_8, %c0_9] : memref<3x64x128xf32, #tpu.memory_space<vmem>>, vector<1x64x128xf32>
    %33 = vector.shape_cast %32 : vector<1x64x128xf32> to vector<64x128xf32>
    %cst_10 = arith.constant dense<0.000000e+00> : vector<32x128xf32>
    %34 = tpu.matmul %26, %33, %cst_10 {dimension_numbers = #tpu.dot_dimension_numbers<[1], [0], [0], [1], [0, 0, 1, 1], [], []>} : vector<32x64xf32>, vector<64x128xf32>, vector<32x128xf32> -> vector<32x128xf32>
    %c1 = arith.constant 1 : index
    %c0_11 = arith.constant 0 : index
    %c0_12 = arith.constant 0 : index
    %35 = vector.load %arg1[%c1, %c0_11, %c0_12] : memref<3x64x128xf32, #tpu.memory_space<vmem>>, vector<1x64x128xf32>
    %36 = vector.shape_cast %35 : vector<1x64x128xf32> to vector<64x128xf32>
    %cst_13 = arith.constant dense<0.000000e+00> : vector<32x128xf32>
    %37 = tpu.matmul %21, %36, %cst_13 {dimension_numbers = #tpu.dot_dimension_numbers<[1], [0], [0], [1], [0, 0, 1, 1], [], []>} : vector<32x64xf32>, vector<64x128xf32>, vector<32x128xf32> -> vector<32x128xf32>
    %38 = arith.addf %34, %37 : vector<32x128xf32>
    %c2 = arith.constant 2 : index
    %c0_14 = arith.constant 0 : index
    %c0_15 = arith.constant 0 : index
    %39 = vector.load %arg1[%c2, %c0_14, %c0_15] : memref<3x64x128xf32, #tpu.memory_space<vmem>>, vector<1x64x128xf32>
    %40 = vector.shape_cast %39 : vector<1x64x128xf32> to vector<64x128xf32>
    %cst_16 = arith.constant dense<0.000000e+00> : vector<32x128xf32>
    %41 = tpu.matmul %31, %40, %cst_16 {dimension_numbers = #tpu.dot_dimension_numbers<[1], [0], [0], [1], [0, 0, 1, 1], [], []>} : vector<32x64xf32>, vector<64x128xf32>, vector<32x128xf32> -> vector<32x128xf32>
    %42 = arith.addf %38, %41 : vector<32x128xf32>
    %cst_17 = arith.constant dense<0.000000e+00> : vector<128xf32>
    %43 = vector.multi_reduction <add>, %42, %cst_17 [0] : vector<32x128xf32> to vector<128xf32>
    %44 = vector.shape_cast %43 : vector<128xf32> to vector<1x128xf32>
    %45 = arith.mulf %42, %42 : vector<32x128xf32>
    %cst_18 = arith.constant dense<0.000000e+00> : vector<128xf32>
    %46 = vector.multi_reduction <add>, %45, %cst_18 [0] : vector<32x128xf32> to vector<128xf32>
    %47 = vector.shape_cast %46 : vector<128xf32> to vector<1x128xf32>
    %48 = tpu.concatenate %44, %47 in 0 : vector<1x128xf32>, vector<1x128xf32> -> vector<2x128xf32>
    %c0_19 = arith.constant 0 : index
    %c0_20 = arith.constant 0 : index
    %49 = vector.load %arg7[%c0_19, %c0_20] : memref<128x128xf32, #tpu.memory_space<vmem>>, vector<128x128xf32>
    %cst_21 = arith.constant dense<0.000000e+00> : vector<2x128xf32>
    %50 = tpu.matmul %48, %49, %cst_21 {dimension_numbers = #tpu.dot_dimension_numbers<[1], [0], [0], [1], [0, 0, 1, 1], [], []>} : vector<2x128xf32>, vector<128x128xf32>, vector<2x128xf32> -> vector<2x128xf32>
    %51 = vector.extract_strided_slice %50 {offsets = [0, 0], sizes = [1, 128], strides = [1, 1]} : vector<2x128xf32> to vector<1x128xf32>
    %cst_22 = arith.constant 0.001953125 : f32
    %52 = vector.broadcast %cst_22 : f32 to vector<1x128xf32>
    %53 = arith.mulf %51, %52 : vector<1x128xf32>
    %54 = vector.extract_strided_slice %50 {offsets = [1, 0], sizes = [1, 128], strides = [1, 1]} : vector<2x128xf32> to vector<1x128xf32>
    %cst_23 = arith.constant 0.001953125 : f32
    %55 = vector.broadcast %cst_23 : f32 to vector<1x128xf32>
    %56 = arith.mulf %54, %55 : vector<1x128xf32>
    %57 = arith.mulf %53, %53 : vector<1x128xf32>
    %58 = arith.subf %56, %57 : vector<1x128xf32>
    %cst_24 = arith.constant 9.99999974E-6 : f32
    %59 = vector.broadcast %cst_24 : f32 to vector<1x128xf32>
    %60 = arith.addf %58, %59 : vector<1x128xf32>
    %61 = math.rsqrt %60 : vector<1x128xf32>
    %c0_25 = arith.constant 0 : index
    %c0_26 = arith.constant 0 : index
    %62 = vector.load %arg3[%c0_25, %c0_26] : memref<1x128xf32, #tpu.memory_space<vmem>>, vector<1x128xf32>
    %63 = arith.mulf %61, %62 : vector<1x128xf32>
    %c0_27 = arith.constant 0 : index
    %c0_28 = arith.constant 0 : index
    %64 = vector.load %arg4[%c0_27, %c0_28] : memref<1x128xf32, #tpu.memory_space<vmem>>, vector<1x128xf32>
    %65 = arith.mulf %53, %63 : vector<1x128xf32>
    %66 = arith.subf %64, %65 : vector<1x128xf32>
    %67 = vector.broadcast %63 : vector<1x128xf32> to vector<32x128xf32>
    %68 = arith.mulf %42, %67 : vector<32x128xf32>
    %69 = vector.broadcast %66 : vector<1x128xf32> to vector<32x128xf32>
    %70 = arith.addf %68, %69 : vector<32x128xf32>
    %cst_29 = arith.constant 0.00999999977 : f32
    %71 = vector.broadcast %cst_29 : f32 to vector<32x128xf32>
    %72 = arith.mulf %71, %70 : vector<32x128xf32>
    %73 = arith.maximumf %70, %72 : vector<32x128xf32>
    %c1_i32_30 = arith.constant 1 : i32
    %74 = tpu.dynamic_rotate %73 by %c1_i32_30 dim 0 : vector<32x128xf32>, i32 -> vector<32x128xf32>
    %cst_31 = arith.constant 0.000000e+00 : f32
    %75 = vector.shape_cast %18 : vector<32x1xi1> to vector<32x1xi1>
    %76 = vector.broadcast %75 : vector<32x1xi1> to vector<32x128xi1>
    %77 = vector.broadcast %cst_31 : f32 to vector<32x128xf32>
    %78 = arith.select %76, %77, %74 : vector<32x128xi1>, vector<32x128xf32>
    %c31_i32_32 = arith.constant 31 : i32
    %79 = tpu.dynamic_rotate %73 by %c31_i32_32 dim 0 : vector<32x128xf32>, i32 -> vector<32x128xf32>
    %cst_33 = arith.constant 0.000000e+00 : f32
    %80 = vector.shape_cast %20 : vector<32x1xi1> to vector<32x1xi1>
    %81 = vector.broadcast %80 : vector<32x1xi1> to vector<32x128xi1>
    %82 = vector.broadcast %cst_33 : f32 to vector<32x128xf32>
    %83 = arith.select %81, %82, %79 : vector<32x128xi1>, vector<32x128xf32>
    %c0_34 = arith.constant 0 : index
    %c0_35 = arith.constant 0 : index
    %c0_36 = arith.constant 0 : index
    %84 = vector.load %arg2[%c0_34, %c0_35, %c0_36] : memref<3x128x128xf32, #tpu.memory_space<vmem>>, vector<1x128x128xf32>
    %85 = vector.shape_cast %84 : vector<1x128x128xf32> to vector<128x128xf32>
    %cst_37 = arith.constant dense<0.000000e+00> : vector<32x128xf32>
    %86 = tpu.matmul %78, %85, %cst_37 {dimension_numbers = #tpu.dot_dimension_numbers<[1], [0], [0], [1], [0, 0, 1, 1], [], []>} : vector<32x128xf32>, vector<128x128xf32>, vector<32x128xf32> -> vector<32x128xf32>
    %c1_38 = arith.constant 1 : index
    %c0_39 = arith.constant 0 : index
    %c0_40 = arith.constant 0 : index
    %87 = vector.load %arg2[%c1_38, %c0_39, %c0_40] : memref<3x128x128xf32, #tpu.memory_space<vmem>>, vector<1x128x128xf32>
    %88 = vector.shape_cast %87 : vector<1x128x128xf32> to vector<128x128xf32>
    %cst_41 = arith.constant dense<0.000000e+00> : vector<32x128xf32>
    %89 = tpu.matmul %73, %88, %cst_41 {dimension_numbers = #tpu.dot_dimension_numbers<[1], [0], [0], [1], [0, 0, 1, 1], [], []>} : vector<32x128xf32>, vector<128x128xf32>, vector<32x128xf32> -> vector<32x128xf32>
    %90 = arith.addf %86, %89 : vector<32x128xf32>
    %c2_42 = arith.constant 2 : index
    %c0_43 = arith.constant 0 : index
    %c0_44 = arith.constant 0 : index
    %91 = vector.load %arg2[%c2_42, %c0_43, %c0_44] : memref<3x128x128xf32, #tpu.memory_space<vmem>>, vector<1x128x128xf32>
    %92 = vector.shape_cast %91 : vector<1x128x128xf32> to vector<128x128xf32>
    %cst_45 = arith.constant dense<0.000000e+00> : vector<32x128xf32>
    %93 = tpu.matmul %83, %92, %cst_45 {dimension_numbers = #tpu.dot_dimension_numbers<[1], [0], [0], [1], [0, 0, 1, 1], [], []>} : vector<32x128xf32>, vector<128x128xf32>, vector<32x128xf32> -> vector<32x128xf32>
    %94 = arith.addf %90, %93 : vector<32x128xf32>
    %cst_46 = arith.constant dense<0.000000e+00> : vector<128xf32>
    %95 = vector.multi_reduction <add>, %94, %cst_46 [0] : vector<32x128xf32> to vector<128xf32>
    %96 = vector.shape_cast %95 : vector<128xf32> to vector<1x128xf32>
    %97 = arith.mulf %94, %94 : vector<32x128xf32>
    %cst_47 = arith.constant dense<0.000000e+00> : vector<128xf32>
    %98 = vector.multi_reduction <add>, %97, %cst_47 [0] : vector<32x128xf32> to vector<128xf32>
    %99 = vector.shape_cast %98 : vector<128xf32> to vector<1x128xf32>
    %100 = tpu.concatenate %96, %99 in 0 : vector<1x128xf32>, vector<1x128xf32> -> vector<2x128xf32>
    %c0_48 = arith.constant 0 : index
    %c0_49 = arith.constant 0 : index
    %101 = vector.load %arg7[%c0_48, %c0_49] : memref<128x128xf32, #tpu.memory_space<vmem>>, vector<128x128xf32>
    %cst_50 = arith.constant dense<0.000000e+00> : vector<2x128xf32>
    %102 = tpu.matmul %100, %101, %cst_50 {dimension_numbers = #tpu.dot_dimension_numbers<[1], [0], [0], [1], [0, 0, 1, 1], [], []>} : vector<2x128xf32>, vector<128x128xf32>, vector<2x128xf32> -> vector<2x128xf32>
    %103 = vector.extract_strided_slice %102 {offsets = [0, 0], sizes = [1, 128], strides = [1, 1]} : vector<2x128xf32> to vector<1x128xf32>
    %cst_51 = arith.constant 0.001953125 : f32
    %104 = vector.broadcast %cst_51 : f32 to vector<1x128xf32>
    %105 = arith.mulf %103, %104 : vector<1x128xf32>
    %106 = vector.extract_strided_slice %102 {offsets = [1, 0], sizes = [1, 128], strides = [1, 1]} : vector<2x128xf32> to vector<1x128xf32>
    %cst_52 = arith.constant 0.001953125 : f32
    %107 = vector.broadcast %cst_52 : f32 to vector<1x128xf32>
    %108 = arith.mulf %106, %107 : vector<1x128xf32>
    %109 = arith.mulf %105, %105 : vector<1x128xf32>
    %110 = arith.subf %108, %109 : vector<1x128xf32>
    %cst_53 = arith.constant 9.99999974E-6 : f32
    %111 = vector.broadcast %cst_53 : f32 to vector<1x128xf32>
    %112 = arith.addf %110, %111 : vector<1x128xf32>
    %113 = math.rsqrt %112 : vector<1x128xf32>
    %c0_54 = arith.constant 0 : index
    %c0_55 = arith.constant 0 : index
    %114 = vector.load %arg5[%c0_54, %c0_55] : memref<1x128xf32, #tpu.memory_space<vmem>>, vector<1x128xf32>
    %115 = arith.mulf %113, %114 : vector<1x128xf32>
    %c0_56 = arith.constant 0 : index
    %c0_57 = arith.constant 0 : index
    %116 = vector.load %arg6[%c0_56, %c0_57] : memref<1x128xf32, #tpu.memory_space<vmem>>, vector<1x128xf32>
    %117 = arith.mulf %105, %115 : vector<1x128xf32>
    %118 = arith.subf %116, %117 : vector<1x128xf32>
    %119 = vector.broadcast %115 : vector<1x128xf32> to vector<32x128xf32>
    %120 = arith.mulf %94, %119 : vector<32x128xf32>
    %121 = vector.broadcast %118 : vector<1x128xf32> to vector<32x128xf32>
    %122 = arith.addf %120, %121 : vector<32x128xf32>
    %cst_58 = arith.constant 0.00999999977 : f32
    %123 = vector.broadcast %cst_58 : f32 to vector<32x128xf32>
    %124 = arith.mulf %123, %122 : vector<32x128xf32>
    %125 = arith.maximumf %122, %124 : vector<32x128xf32>
    %c0_59 = arith.constant 0 : index
    %c0_60 = arith.constant 0 : index
    %126 = vector.load %arg8[%c0_59, %c0_60] : memref<32x128xf32, #tpu.memory_space<vmem>>, vector<32x128xf32>
    tpu.vector_store %arg8[%c0_59, %c0_60], %125 {strides = array<i32>} : memref<32x128xf32, #tpu.memory_space<vmem>>, vector<32x128xf32>,
    return
  }
}

</mosaic_0001>

<llo_original>
// kernel: double_convolutional.1
$region0: #{double_convolutional.1}
  #allocation0 [shape = 'u32[]', space=smem, size = 0x4, offset = 0x4, fixed_abs, tag = 'smem constant byte address 0x4 - core index']
  #allocation1 [shape = 'u32[144,128]{1,0:T(1,128)}', space=vmem, size = 0x12000, scoped, tag = 'internal scratch']
  %s0 = inlined_call_operand.vmem [shape: f32[32,64], index: 0, kind: input, shape index: {}]
  %s1 = inlined_call_operand.hbm [shape: f32[3,64,128], index: 1, kind: input, shape index: {}]
  %s2 = inlined_call_operand.vmem [shape: f32[3,128,128], index: 2, kind: input, shape index: {}]
  %s3 = inlined_call_operand.vmem [shape: f32[1,128], index: 3, kind: input, shape index: {}]
  %s4 = inlined_call_operand.vmem [shape: f32[1,128], index: 4, kind: input, shape index: {}]
  %s5 = inlined_call_operand.vmem [shape: f32[1,128], index: 5, kind: input, shape index: {}]
  %s6 = inlined_call_operand.vmem [shape: f32[1,128], index: 6, kind: input, shape index: {}]
  %s7 = inlined_call_operand.vmem [shape: f32[128,128], index: 7, kind: input, shape index: {}]
  %s8 = inlined_call_operand.vmem [shape: f32[32,128], index: 8, kind: output, shape index: {}]
  %s9 = sld [smem:[#allocation0]]
  $region46: #{double_convolutional.1} parent=0
    _
  %s11 = ssub.s32 1, %s9
  %s12 = scalar_select 0, %s11, %s9
  $region1: #{double_convolutional.1} parent=0
    #allocation2 [shape = 'u8[98304]{0}', space=vmem, size = 0x18000, scoped, tag = 'input window, operand 1, single buffered']
    #allocation3 [shape = 's32[1]{0}', space=sflag, size = 0x4, scoped, tag = 'scoped memory for double_convolutional.1']
    %13 = vsyncpa [#allocation3], 0
    // Predicated region
    $region2: #{double_convolutional.1} parent=1 // pred_check
      _
    $region3: #{double_convolutional.1} parent=1 // pred_check_branch
      %15 = sbr.rel (0) target = $region5
    $region4: #{double_convolutional.1} parent=1 // pred_region
      _
    $region5: #{double_convolutional.1} parent=1 // pred_fallthru
      _
    // Predicated region
    $region6: #{double_convolutional.1} parent=1 // pred_check
      _
    $region7: #{double_convolutional.1} parent=1 // pred_check_branch
      %17 = sbr.rel (0) target = $region9
    $region8: #{double_convolutional.1} parent=1 // pred_region
      %s19 = ssub.s32 3072, 3072
      %20 = vsyncadd [#allocation3], %s19
      %s21 = sshll.u32 [#allocation2], 4
      %s22 = int_to_ptr.vmem [resolvable:$true] %s21
      %27 = dma.hbm_to_vmem [thread:$0]  %s1, 3072, %s22, [#allocation3], 128, 128, 8
    $region9: #{double_convolutional.1} parent=1 // pred_fallthru
      _
    // Predicated region
    $region10: #{double_convolutional.1} parent=1 // pred_check
      _
    $region11: #{double_convolutional.1} parent=1 // pred_check_branch
      %29 = sbr.rel (0) target = $region13
    $region12: #{double_convolutional.1} parent=1 // pred_region
      _
    $region13: #{double_convolutional.1} parent=1 // pred_fallthru
      _
    // Predicated region
    $region14: #{double_convolutional.1} parent=1 // pred_check
      _
    $region15: #{double_convolutional.1} parent=1 // pred_check_branch
      %31 = sbr.rel (0) target = $region17
    $region16: #{double_convolutional.1} parent=1 // pred_region
      _
    $region17: #{double_convolutional.1} parent=1 // pred_fallthru
      _
    // Predicated region
    $region18: #{double_convolutional.1} parent=1 // pred_check
      _
    $region19: #{double_convolutional.1} parent=1 // pred_check_branch
      %33 = sbr.rel (0) target = $region21
    $region20: #{double_convolutional.1} parent=1 // pred_region
      _
    $region21: #{double_convolutional.1} parent=1 // pred_fallthru
      _
    // Predicated region
    $region22: #{double_convolutional.1} parent=1 // pred_check
      _
    $region23: #{double_convolutional.1} parent=1 // pred_check_branch
      %35 = sbr.rel (0) target = $region25
    $region24: #{double_convolutional.1} parent=1 // pred_region
      _
    $region25: #{double_convolutional.1} parent=1 // pred_fallthru
      _
    // Predicated region
    $region26: #{double_convolutional.1} parent=1 // pred_check
      _
    $region27: #{double_convolutional.1} parent=1 // pred_check_branch
      %37 = sbr.rel (0) target = $region29
    $region28: #{double_convolutional.1} parent=1 // pred_region
      _
    $region29: #{double_convolutional.1} parent=1 // pred_fallthru
      _
    // Predicated region
    $region30: #{double_convolutional.1} parent=1 // pred_check
      _
    $region31: #{double_convolutional.1} parent=1 // pred_check_branch
      %39 = sbr.rel (0) target = $region33
    $region32: #{double_convolutional.1} parent=1 // pred_region
      _
    $region33: #{double_convolutional.1} parent=1 // pred_fallthru
      _
    // Predicated region
    $region34: #{double_convolutional.1} parent=1 // pred_check
      _
    $region35: #{double_convolutional.1} parent=1 // pred_check_branch
      %41 = sbr.rel (0) target = $region37
    $region36: #{double_convolutional.1} parent=1 // pred_region
      %42 = dma.done [#allocation3], 3072
    $region37: #{double_convolutional.1} parent=1 // pred_fallthru
      _
    %v43 = vlaneseq
    %v44 = vshrl.u32 %v43, 7
    %v45 = vadd.s32 %v44, 8
    %v46 = vadd.s32 %v44, 16
    %v47 = vadd.s32 %v44, 24
    %vm48 = vcmp.lt.s32.totalorder %v44, 0
    %v49 = vsub.s32 0, %v44
    %v50 = vsel %vm48, %v49, %v44
    %v51 = vshrl.u32 %v50, 4
    %v52 = vand.u32 %v50, 15
    %v53 = vsub.s32 0, %v52
    %v54 = vsel %vm48, %v53, %v52
    %vm55 = vcmp.lt.s32.totalorder %v45, 0
    %v56 = vsub.s32 0, %v45
    %v57 = vsel %vm55, %v56, %v45
    %v58 = vshrl.u32 %v57, 4
    %v59 = vand.u32 %v57, 15
    %v60 = vsub.s32 0, %v59
    %v61 = vsel %vm55, %v60, %v59
    %vm62 = vcmp.lt.s32.totalorder %v46, 0
    %v63 = vsub.s32 0, %v46
    %v64 = vsel %vm62, %v63, %v46
    %v65 = vshrl.u32 %v64, 4
    %v66 = vand.u32 %v64, 15
    %v67 = vsub.s32 0, %v66
    %v68 = vsel %vm62, %v67, %v66
    %vm69 = vcmp.lt.s32.totalorder %v47, 0
    %v70 = vsub.s32 0, %v47
    %v71 = vsel %vm69, %v70, %v47
    %v72 = vshrl.u32 %v71, 4
    %v73 = vand.u32 %v71, 15
    %v74 = vsub.s32 0, %v73
    %v75 = vsel %vm69, %v74, %v73
    %vm76 = vcmp.ne.s32.totalorder %v54, 0
    %vm77 = vcmp.ne.s32.totalorder %v61, 0
    %vm78 = vcmp.ne.s32.totalorder %v68, 0
    %vm79 = vcmp.ne.s32.totalorder %v75, 0
    %vm80 = vcmp.lt.s32.totalorder %v54, 0
    %vm81 = vcmp.lt.s32.totalorder %v61, 0
    %vm82 = vcmp.lt.s32.totalorder %v68, 0
    %vm83 = vcmp.lt.s32.totalorder %v75, 0
    %vm84 = vmand %vm80, %vm76
    %vm85 = vmand %vm81, %vm77
    %vm86 = vmand %vm82, %vm78
    %vm87 = vmand %vm83, %vm79
    %v88 = vadd.s32 %v54, 16
    %v89 = vadd.s32 %v61, 16
    %v90 = vadd.s32 %v68, 16
    %v91 = vadd.s32 %v75, 16
    %v92 = vsel %vm84, %v88, %v54
    %v93 = vsel %vm85, %v89, %v61
    %v94 = vsel %vm86, %v90, %v68
    %v95 = vsel %vm87, %v91, %v75
    %vm96 = vcmp.eq.s32.totalorder %v92, 0
    %vm97 = vcmp.eq.s32.totalorder %v93, 0
    %vm98 = vcmp.eq.s32.totalorder %v94, 0
    %vm99 = vcmp.eq.s32.totalorder %v95, 0
    %vm100 = vcmp.eq.s32.totalorder %v92, 15
    %vm101 = vcmp.eq.s32.totalorder %v93, 15
    %vm102 = vcmp.eq.s32.totalorder %v94, 15
    %vm103 = vcmp.eq.s32.totalorder %v95, 15
    %v104 = vld [vmem:[%s0] sm:$0xff]
    %v105 = vld [vmem:[%s0 + $0x8] sm:$0xff]
    %v106 = vld [vmem:[%s0 + $0x10] sm:$0xff]
    %v107 = vld [vmem:[%s0 + $0x18] sm:$0xff]
    %v108 = vrot.slane %v104, 7
    %v109 = vrot.slane %v105, 7
    %v110 = vrot.slane %v106, 7
    %v111 = vrot.slane %v107, 7
    %vm112 = vcmp.lt.s32.totalorder %v44, 1
    %v113 = vsel %vm112, %v110, %v111
    %v114 = vsel %vm112, %v109, %v110
    %v115 = vsel %vm112, %v108, %v109
    %v116 = vsel %vm112, %v111, %v108
    %v117 = vsel %vm96, 1, 0
    %v118 = vsel %vm97, 1, 0
    %v119 = vsel %vm98, 1, 0
    %v120 = vsel %vm99, 1, 0
    %vm121 = vcmp.eq.s32.totalorder %v117, 1
    %vm122 = vcmp.eq.s32.totalorder %v118, 1
    %vm123 = vcmp.eq.s32.totalorder %v119, 1
    %vm124 = vcmp.eq.s32.totalorder %v120, 1
    %v125 = vsel %vm121, 0.0, %v116
    %v126 = vsel %vm122, 0.0, %v115
    %v127 = vsel %vm123, 0.0, %v114
    %v128 = vsel %vm124, 0.0, %v113
    %v129 = vrot.slane %v104, 1
    %v130 = vrot.slane %v105, 1
    %v131 = vrot.slane %v106, 1
    %v132 = vrot.slane %v107, 1
    %vm133 = vcmp.lt.s32.totalorder %v44, 7
    %v134 = vsel %vm133, %v131, %v132
    %v135 = vsel %vm133, %v130, %v131
    %v136 = vsel %vm133, %v129, %v130
    %v137 = vsel %vm133, %v132, %v129
    %v138 = vsel %vm100, 1, 0
    %v139 = vsel %vm101, 1, 0
    %v140 = vsel %vm102, 1, 0
    %v141 = vsel %vm103, 1, 0
    %vm142 = vcmp.eq.s32.totalorder %v138, 1
    %vm143 = vcmp.eq.s32.totalorder %v139, 1
    %vm144 = vcmp.eq.s32.totalorder %v140, 1
    %vm145 = vcmp.eq.s32.totalorder %v141, 1
    %v146 = vsel %vm142, 0.0, %v136
    %v147 = vsel %vm143, 0.0, %v135
    %v148 = vsel %vm144, 0.0, %v134
    %v149 = vsel %vm145, 0.0, %v137
    %v150 = vld [vmem:[#allocation2] sm:$0xff]
    %v151 = vld [vmem:[#allocation2 + $0x8] sm:$0xff]
    %v152 = vld [vmem:[#allocation2 + $0x10] sm:$0xff]
    %v153 = vld [vmem:[#allocation2 + $0x18] sm:$0xff]
    %v154 = vld [vmem:[#allocation2 + $0x20] sm:$0xff]
    %v155 = vld [vmem:[#allocation2 + $0x28] sm:$0xff]
    %v156 = vld [vmem:[#allocation2 + $0x30] sm:$0xff]
    %v157 = vld [vmem:[#allocation2 + $0x38] sm:$0xff]
    %s158 = scalar_lea.vmem [#allocation2], 64
    %v159 = vld [vmem:[%s158] sm:$0xff]
    %v160 = vld [vmem:[%s158 + $0x8] sm:$0xff]
    %v161 = vld [vmem:[%s158 + $0x10] sm:$0xff]
    %v162 = vld [vmem:[%s158 + $0x18] sm:$0xff]
    %v163 = vld [vmem:[%s158 + $0x20] sm:$0xff]
    %v164 = vld [vmem:[%s158 + $0x28] sm:$0xff]
    %v165 = vld [vmem:[%s158 + $0x30] sm:$0xff]
    %v166 = vld [vmem:[%s158 + $0x38] sm:$0xff]
    %vm167 = vcmask 523264
    %v169 = vsel %vm167, %v104, 0
    %v172 = vsel %vm167, %v105, 0
    %v175 = vsel %vm167, %v106, 0
    %v178 = vsel %vm167, %v107, 0
    %180 = vmatprep.subr.mxu0 0.0
    %181 = vmatpush1.msra.mxu0 %v159
    %182 = vmatprep.subr.mxu0 0.0
    %183 = vmatpush1.msra.mxu0 %v160
    %184 = vmatprep.subr.mxu0 0.0
    %185 = vmatpush1.msra.mxu0 %v161
    %186 = vmatprep.subr.mxu0 0.0
    %187 = vmatpush1.msra.mxu0 %v162
    %188 = vmatprep.subr.mxu0 0.0
    %189 = vmatpush1.msra.mxu0 %v163
    %190 = vmatprep.subr.mxu0 0.0
    %191 = vmatpush1.msra.mxu0 %v164
    %192 = vmatprep.subr.mxu0 0.0
    %193 = vmatpush1.msra.mxu0 %v165
    %194 = vmatprep.subr.mxu0 0.0
    %195 = vmatpush1.msra.mxu0 %v166
    %196 = vmatprep.subr.mxu0 0.0
    %197 = vmatpush1.msra.mxu0 0.0
    %198 = vmatprep.subr.mxu0 0.0
    %199 = vmatpush1.msra.mxu0 0.0
    %200 = vmatprep.subr.mxu0 0.0
    %201 = vmatpush1.msra.mxu0 0.0
    %202 = vmatprep.subr.mxu0 0.0
    %203 = vmatpush1.msra.mxu0 0.0
    %204 = vmatprep.subr.mxu0 0.0
    %205 = vmatpush1.msra.mxu0 0.0
    %206 = vmatprep.subr.mxu0 0.0
    %207 = vmatpush1.msra.mxu0 0.0
    %208 = vmatprep.subr.mxu0 0.0
    %209 = vmatpush1.msra.mxu0 0.0
    %210 = vmatprep.subr.mxu0 0.0
    %211 = vmatpush1.msra.mxu0 0.0
    %212 = vmatprep.subr.mxu0 0.0
    %213 = vmatpush1.msra.mxu0 0.0
    %214 = vmatprep.subr.mxu0 0.0
    %215 = vmatpush1.msra.mxu0 0.0
    %216 = vmatprep.subr.mxu0 0.0
    %217 = vmatpush1.msra.mxu0 0.0
    %218 = vmatprep.subr.mxu0 0.0
    %219 = vmatpush1.msra.mxu0 0.0
    %220 = vmatprep.subr.mxu0 0.0
    %221 = vmatpush1.msra.mxu0 0.0
    %222 = vmatprep.subr.mxu0 0.0
    %223 = vmatpush1.msra.mxu0 0.0
    %224 = vmatprep.subr.mxu0 0.0
    %225 = vmatpush1.msra.mxu0 0.0
    %226 = vmatprep.subr.mxu0 0.0
    %227 = vmatpush1.msra.mxu0 0.0
    %228 = vmatprep.subr.mxu0 0.0
    %229 = vmatpush1.msra.mxu0 0.0
    %230 = vmatprep.subr.mxu0 0.0
    %231 = vmatpush1.msra.mxu0 0.0
    %232 = vmatprep.subr.mxu0 0.0
    %233 = vmatpush1.msra.mxu0 0.0
    %234 = vmatprep.subr.mxu0 0.0
    %235 = vmatpush1.msra.mxu0 0.0
    %236 = vmatprep.subr.mxu0 0.0
    %237 = vmatpush1.msra.mxu0 0.0
    %238 = vmatprep.subr.mxu0 0.0
    %239 = vmatpush1.msra.mxu0 0.0
    %240 = vmatprep.subr.mxu0 0.0
    %241 = vmatpush1.msra.mxu0 0.0
    %242 = vmatprep.subr.mxu0 0.0
    %243 = vmatpush1.msra.mxu0 0.0
    %244 = vmatprep.mubr.f32.mxu0 0.0
    %245 = vmatmul.mubr.f32.gmra.mrb[0].mxu0 %v169
    %v246 = vpop.f32.mrb[0].mxu0
    %v247 = vadd.f32 0.0, %v246
    %v248 = vpop.f32.mrb[0].mxu0
    %249 = vmatprep.mubr.f32.mxu0 0.0
    %250 = vmatmul.mubr.f32.gmra.mrb[0].mxu0 %v172
    %v251 = vpop.f32.mrb[0].mxu0
    %v252 = vadd.f32 0.0, %v251
    %v253 = vpop.f32.mrb[0].mxu0
    %254 = vmatprep.mubr.f32.mxu0 0.0
    %255 = vmatmul.mubr.f32.gmra.mrb[0].mxu0 %v175
    %v256 = vpop.f32.mrb[0].mxu0
    %v257 = vadd.f32 0.0, %v256
    %v258 = vpop.f32.mrb[0].mxu0
    %259 = vmatprep.mubr.f32.mxu0 0.0
    %260 = vmatmul.mubr.f32.gmra.mrb[0].mxu0 %v178
    %v261 = vpop.f32.mrb[0].mxu0
    %v262 = vadd.f32 0.0, %v261
    %v263 = vpop.f32.mrb[0].mxu0
    %264 = vdwg.mxu0
    %v266 = vsel %vm167, %v125, 0
    %v269 = vsel %vm167, %v126, 0
    %v272 = vsel %vm167, %v127, 0
    %v275 = vsel %vm167, %v128, 0
    %277 = vmatprep.subr.mxu0 0.0
    %278 = vmatpush1.msra.mxu0 %v150
    %279 = vmatprep.subr.mxu0 0.0
    %280 = vmatpush1.msra.mxu0 %v151
    %281 = vmatprep.subr.mxu0 0.0
    %282 = vmatpush1.msra.mxu0 %v152
    %283 = vmatprep.subr.mxu0 0.0
    %284 = vmatpush1.msra.mxu0 %v153
    %285 = vmatprep.subr.mxu0 0.0
    %286 = vmatpush1.msra.mxu0 %v154
    %287 = vmatprep.subr.mxu0 0.0
    %288 = vmatpush1.msra.mxu0 %v155
    %289 = vmatprep.subr.mxu0 0.0
    %290 = vmatpush1.msra.mxu0 %v156
    %291 = vmatprep.subr.mxu0 0.0
    %292 = vmatpush1.msra.mxu0 %v157
    %293 = vmatprep.subr.mxu0 0.0
    %294 = vmatpush1.msra.mxu0 0.0
    %295 = vmatprep.subr.mxu0 0.0
    %296 = vmatpush1.msra.mxu0 0.0
    %297 = vmatprep.subr.mxu0 0.0
    %298 = vmatpush1.msra.mxu0 0.0
    %299 = vmatprep.subr.mxu0 0.0
    %300 = vmatpush1.msra.mxu0 0.0
    %301 = vmatprep.subr.mxu0 0.0
    %302 = vmatpush1.msra.mxu0 0.0
    %303 = vmatprep.subr.mxu0 0.0
    %304 = vmatpush1.msra.mxu0 0.0
    %305 = vmatprep.subr.mxu0 0.0
    %306 = vmatpush1.msra.mxu0 0.0
    %307 = vmatprep.subr.mxu0 0.0
    %308 = vmatpush1.msra.mxu0 0.0
    %309 = vmatprep.subr.mxu0 0.0
    %310 = vmatpush1.msra.mxu0 0.0
    %311 = vmatprep.subr.mxu0 0.0
    %312 = vmatpush1.msra.mxu0 0.0
    %313 = vmatprep.subr.mxu0 0.0
    %314 = vmatpush1.msra.mxu0 0.0
    %315 = vmatprep.subr.mxu0 0.0
    %316 = vmatpush1.msra.mxu0 0.0
    %317 = vmatprep.subr.mxu0 0.0
    %318 = vmatpush1.msra.mxu0 0.0
    %319 = vmatprep.subr.mxu0 0.0
    %320 = vmatpush1.msra.mxu0 0.0
    %321 = vmatprep.subr.mxu0 0.0
    %322 = vmatpush1.msra.mxu0 0.0
    %323 = vmatprep.subr.mxu0 0.0
    %324 = vmatpush1.msra.mxu0 0.0
    %325 = vmatprep.subr.mxu0 0.0
    %326 = vmatpush1.msra.mxu0 0.0
    %327 = vmatprep.subr.mxu0 0.0
    %328 = vmatpush1.msra.mxu0 0.0
    %329 = vmatprep.subr.mxu0 0.0
    %330 = vmatpush1.msra.mxu0 0.0
    %331 = vmatprep.subr.mxu0 0.0
    %332 = vmatpush1.msra.mxu0 0.0
    %333 = vmatprep.subr.mxu0 0.0
    %334 = vmatpush1.msra.mxu0 0.0
    %335 = vmatprep.subr.mxu0 0.0
    %336 = vmatpush1.msra.mxu0 0.0
    %337 = vmatprep.subr.mxu0 0.0
    %338 = vmatpush1.msra.mxu0 0.0
    %339 = vmatprep.subr.mxu0 0.0
    %340 = vmatpush1.msra.mxu0 0.0
    %341 = vmatprep.mubr.f32.mxu0 0.0
    %342 = vmatmul.mubr.f32.gmra.mrb[0].mxu0 %v266
    %v343 = vpop.f32.mrb[0].mxu0
    %v344 = vadd.f32 %v247, %v343
    %v345 = vpop.f32.mrb[0].mxu0
    %346 = vmatprep.mubr.f32.mxu0 0.0
    %347 = vmatmul.mubr.f32.gmra.mrb[0].mxu0 %v269
    %v348 = vpop.f32.mrb[0].mxu0
    %v349 = vadd.f32 %v252, %v348
    %v350 = vpop.f32.mrb[0].mxu0
    %351 = vmatprep.mubr.f32.mxu0 0.0
    %352 = vmatmul.mubr.f32.gmra.mrb[0].mxu0 %v272
    %v353 = vpop.f32.mrb[0].mxu0
    %v354 = vadd.f32 %v257, %v353
    %v355 = vpop.f32.mrb[0].mxu0
    %356 = vmatprep.mubr.f32.mxu0 0.0
    %357 = vmatmul.mubr.f32.gmra.mrb[0].mxu0 %v275
    %v358 = vpop.f32.mrb[0].mxu0
    %v359 = vadd.f32 %v262, %v358
    %v360 = vpop.f32.mrb[0].mxu0
    %361 = vdwg.mxu0
    %s362 = scalar_lea.vmem [#allocation2], 128
    %v363 = vld [vmem:[%s362] sm:$0xff]
    %v364 = vld [vmem:[%s362 + $0x8] sm:$0xff]
    %v365 = vld [vmem:[%s362 + $0x10] sm:$0xff]
    %v366 = vld [vmem:[%s362 + $0x18] sm:$0xff]
    %v367 = vld [vmem:[%s362 + $0x20] sm:$0xff]
    %v368 = vld [vmem:[%s362 + $0x28] sm:$0xff]
    %v369 = vld [vmem:[%s362 + $0x30] sm:$0xff]
    %v370 = vld [vmem:[%s362 + $0x38] sm:$0xff]
    %v372 = vsel %vm167, %v146, 0
    %v375 = vsel %vm167, %v147, 0
    %v378 = vsel %vm167, %v148, 0
    %v381 = vsel %vm167, %v149, 0
    %383 = vmatprep.subr.mxu0 0.0
    %384 = vmatpush1.msra.mxu0 %v363
    %385 = vmatprep.subr.mxu0 0.0
    %386 = vmatpush1.msra.mxu0 %v364
    %387 = vmatprep.subr.mxu0 0.0
    %388 = vmatpush1.msra.mxu0 %v365
    %389 = vmatprep.subr.mxu0 0.0
    %390 = vmatpush1.msra.mxu0 %v366
    %391 = vmatprep.subr.mxu0 0.0
    %392 = vmatpush1.msra.mxu0 %v367
    %393 = vmatprep.subr.mxu0 0.0
    %394 = vmatpush1.msra.mxu0 %v368
    %395 = vmatprep.subr.mxu0 0.0
    %396 = vmatpush1.msra.mxu0 %v369
    %397 = vmatprep.subr.mxu0 0.0
    %398 = vmatpush1.msra.mxu0 %v370
    %399 = vmatprep.subr.mxu0 0.0
    %400 = vmatpush1.msra.mxu0 0.0
    %401 = vmatprep.subr.mxu0 0.0
    %402 = vmatpush1.msra.mxu0 0.0
    %403 = vmatprep.subr.mxu0 0.0
    %404 = vmatpush1.msra.mxu0 0.0
    %405 = vmatprep.subr.mxu0 0.0
    %406 = vmatpush1.msra.mxu0 0.0
    %407 = vmatprep.subr.mxu0 0.0
    %408 = vmatpush1.msra.mxu0 0.0
    %409 = vmatprep.subr.mxu0 0.0
    %410 = vmatpush1.msra.mxu0 0.0
    %411 = vmatprep.subr.mxu0 0.0
    %412 = vmatpush1.msra.mxu0 0.0
    %413 = vmatprep.subr.mxu0 0.0
    %414 = vmatpush1.msra.mxu0 0.0
    %415 = vmatprep.subr.mxu0 0.0
    %416 = vmatpush1.msra.mxu0 0.0
    %417 = vmatprep.subr.mxu0 0.0
    %418 = vmatpush1.msra.mxu0 0.0
    %419 = vmatprep.subr.mxu0 0.0
    %420 = vmatpush1.msra.mxu0 0.0
    %421 = vmatprep.subr.mxu0 0.0
    %422 = vmatpush1.msra.mxu0 0.0
    %423 = vmatprep.subr.mxu0 0.0
    %424 = vmatpush1.msra.mxu0 0.0
    %425 = vmatprep.subr.mxu0 0.0
    %426 = vmatpush1.msra.mxu0 0.0
    %427 = vmatprep.subr.mxu0 0.0
    %428 = vmatpush1.msra.mxu0 0.0
    %429 = vmatprep.subr.mxu0 0.0
    %430 = vmatpush1.msra.mxu0 0.0
    %431 = vmatprep.subr.mxu0 0.0
    %432 = vmatpush1.msra.mxu0 0.0
    %433 = vmatprep.subr.mxu0 0.0
    %434 = vmatpush1.msra.mxu0 0.0
    %435 = vmatprep.subr.mxu0 0.0
    %436 = vmatpush1.msra.mxu0 0.0
    %437 = vmatprep.subr.mxu0 0.0
    %438 = vmatpush1.msra.mxu0 0.0
    %439 = vmatprep.subr.mxu0 0.0
    %440 = vmatpush1.msra.mxu0 0.0
    %441 = vmatprep.subr.mxu0 0.0
    %442 = vmatpush1.msra.mxu0 0.0
    %443 = vmatprep.subr.mxu0 0.0
    %444 = vmatpush1.msra.mxu0 0.0
    %445 = vmatprep.subr.mxu0 0.0
    %446 = vmatpush1.msra.mxu0 0.0
    %447 = vmatprep.mubr.f32.mxu0 0.0
    %448 = vmatmul.mubr.f32.gmra.mrb[0].mxu0 %v372
    %v449 = vpop.f32.mrb[0].mxu0
    %v450 = vadd.f32 0.0, %v449
    %v451 = vpop.f32.mrb[0].mxu0
    %452 = vmatprep.mubr.f32.mxu0 0.0
    %453 = vmatmul.mubr.f32.gmra.mrb[0].mxu0 %v375
    %v454 = vpop.f32.mrb[0].mxu0
    %v455 = vadd.f32 0.0, %v454
    %v456 = vpop.f32.mrb[0].mxu0
    %457 = vmatprep.mubr.f32.mxu0 0.0
    %458 = vmatmul.mubr.f32.gmra.mrb[0].mxu0 %v378
    %v459 = vpop.f32.mrb[0].mxu0
    %v460 = vadd.f32 0.0, %v459
    %v461 = vpop.f32.mrb[0].mxu0
    %462 = vmatprep.mubr.f32.mxu0 0.0
    %463 = vmatmul.mubr.f32.gmra.mrb[0].mxu0 %v381
    %v464 = vpop.f32.mrb[0].mxu0
    %v465 = vadd.f32 0.0, %v464
    %v466 = vpop.f32.mrb[0].mxu0
    %467 = vdwg.mxu0
    %v468 = vadd.f32 %v344, %v450
    %v469 = vadd.f32 %v349, %v455
    %v470 = vadd.f32 %v354, %v460
    %v471 = vadd.f32 %v359, %v465
    %v472 = vadd.f32 %v468, %v469
    %v473 = vadd.f32 %v472, %v470
    %v474 = vadd.f32 %v473, %v471
    %v475 = vrot.slane %v474, 4
    %v476 = vadd.f32 %v474, %v475
    %v477 = vrot.slane %v476, 2
    %v478 = vadd.f32 %v476, %v477
    %v479 = vrot.slane %v478, 1
    %v480 = vadd.f32 %v478, %v479
    %v481 = vmul.f32 %v468, %v468
    %v482 = vmul.f32 %v469, %v469
    %v483 = vmul.f32 %v470, %v470
    %v484 = vmul.f32 %v471, %v471
    %v485 = vadd.f32 %v481, %v482
    %v486 = vadd.f32 %v485, %v483
    %v487 = vadd.f32 %v486, %v484
    %v488 = vrot.slane %v487, 4
    %v489 = vadd.f32 %v487, %v488
    %v490 = vrot.slane %v489, 2
    %v491 = vadd.f32 %v489, %v490
    %v492 = vrot.slane %v491, 1
    %v493 = vadd.f32 %v491, %v492
    %vm494 = vcmask 1040384
    %v495 = vsel %vm494, %v480, %v493
    %v496 = vld [vmem:[%s7] sm:$0xff]
    %v497 = vld [vmem:[%s7 + $0x8] sm:$0xff]
    %v498 = vld [vmem:[%s7 + $0x10] sm:$0xff]
    %v499 = vld [vmem:[%s7 + $0x18] sm:$0xff]
    %v500 = vld [vmem:[%s7 + $0x20] sm:$0xff]
    %v501 = vld [vmem:[%s7 + $0x28] sm:$0xff]
    %v502 = vld [vmem:[%s7 + $0x30] sm:$0xff]
    %v503 = vld [vmem:[%s7 + $0x38] sm:$0xff]
    %v504 = vld [vmem:[%s7 + $0x40] sm:$0xff]
    %v505 = vld [vmem:[%s7 + $0x48] sm:$0xff]
    %v506 = vld [vmem:[%s7 + $0x50] sm:$0xff]
    %v507 = vld [vmem:[%s7 + $0x58] sm:$0xff]
    %v508 = vld [vmem:[%s7 + $0x60] sm:$0xff]
    %v509 = vld [vmem:[%s7 + $0x68] sm:$0xff]
    %v510 = vld [vmem:[%s7 + $0x70] sm:$0xff]
    %v511 = vld [vmem:[%s7 + $0x78] sm:$0xff]
    %512 = vmatprep.subr.mxu0 0.0
    %513 = vmatpush1.msra.mxu0 %v496
    %514 = vmatprep.subr.mxu0 0.0
    %515 = vmatpush1.msra.mxu0 %v497
    %516 = vmatprep.subr.mxu0 0.0
    %517 = vmatpush1.msra.mxu0 %v498
    %518 = vmatprep.subr.mxu0 0.0
    %519 = vmatpush1.msra.mxu0 %v499
    %520 = vmatprep.subr.mxu0 0.0
    %521 = vmatpush1.msra.mxu0 %v500
    %522 = vmatprep.subr.mxu0 0.0
    %523 = vmatpush1.msra.mxu0 %v501
    %524 = vmatprep.subr.mxu0 0.0
    %525 = vmatpush1.msra.mxu0 %v502
    %526 = vmatprep.subr.mxu0 0.0
    %527 = vmatpush1.msra.mxu0 %v503
    %528 = vmatprep.subr.mxu0 0.0
    %529 = vmatpush1.msra.mxu0 %v504
    %530 = vmatprep.subr.mxu0 0.0
    %531 = vmatpush1.msra.mxu0 %v505
    %532 = vmatprep.subr.mxu0 0.0
    %533 = vmatpush1.msra.mxu0 %v506
    %534 = vmatprep.subr.mxu0 0.0
    %535 = vmatpush1.msra.mxu0 %v507
    %536 = vmatprep.subr.mxu0 0.0
    %537 = vmatpush1.msra.mxu0 %v508
    %538 = vmatprep.subr.mxu0 0.0
    %539 = vmatpush1.msra.mxu0 %v509
    %540 = vmatprep.subr.mxu0 0.0
    %541 = vmatpush1.msra.mxu0 %v510
    %542 = vmatprep.subr.mxu0 0.0
    %543 = vmatpush1.msra.mxu0 %v511
    %544 = vmatprep.subr.mxu0 0.0
    %545 = vmatpush1.msra.mxu0 0.0
    %546 = vmatprep.subr.mxu0 0.0
    %547 = vmatpush1.msra.mxu0 0.0
    %548 = vmatprep.subr.mxu0 0.0
    %549 = vmatpush1.msra.mxu0 0.0
    %550 = vmatprep.subr.mxu0 0.0
    %551 = vmatpush1.msra.mxu0 0.0
    %552 = vmatprep.subr.mxu0 0.0
    %553 = vmatpush1.msra.mxu0 0.0
    %554 = vmatprep.subr.mxu0 0.0
    %555 = vmatpush1.msra.mxu0 0.0
    %556 = vmatprep.subr.mxu0 0.0
    %557 = vmatpush1.msra.mxu0 0.0
    %558 = vmatprep.subr.mxu0 0.0
    %559 = vmatpush1.msra.mxu0 0.0
    %560 = vmatprep.subr.mxu0 0.0
    %561 = vmatpush1.msra.mxu0 0.0
    %562 = vmatprep.subr.mxu0 0.0
    %563 = vmatpush1.msra.mxu0 0.0
    %564 = vmatprep.subr.mxu0 0.0
    %565 = vmatpush1.msra.mxu0 0.0
    %566 = vmatprep.subr.mxu0 0.0
    %567 = vmatpush1.msra.mxu0 0.0
    %568 = vmatprep.subr.mxu0 0.0
    %569 = vmatpush1.msra.mxu0 0.0
    %570 = vmatprep.subr.mxu0 0.0
    %571 = vmatpush1.msra.mxu0 0.0
    %572 = vmatprep.subr.mxu0 0.0
    %573 = vmatpush1.msra.mxu0 0.0
    %574 = vmatprep.subr.mxu0 0.0
    %575 = vmatpush1.msra.mxu0 0.0
    %576 = vmatprep.mubr.f32.mxu0 0.0
    %577 = vmatmul.mubr.f32.gmra.mrb[0].mxu0 %v495
    %v578 = vpop.f32.mrb[0].mxu0
    %v579 = vadd.f32 0.0, %v578
    %v580 = vpop.f32.mrb[0].mxu0
    %581 = vdwg.mxu0
    %v582 = vmul.f32 %v579, 0.001953125
    %v583 = vmul.f32 %v582, %v582
    %v585 = vrot.slane %v583, 7
    %v587 = vsub.f32 %v582, %v585
    %v588 = vadd.f32 %v587, 1e-05
    %v589 = vrsqrt.pop %v588
    %v590 = vld [vmem:[%s3] sm:$0x1]
    %v592 = vlaneseq
    %v593 = vshrl.u32 %v592, 7
    %v594 = vsub.s32 0, %v593
    %v595 = vrot.slane %v590, %v594
    %v597 = vmul.f32 %v589, %v595
    %v598 = vld [vmem:[%s4] sm:$0x1]
    %v600 = vrot.slane %v597, 1
    %v602 = vmul.f32 %v582, %v600
    %v603 = vsub.f32 %v598, %v602
    %v604 = vlaneseq
    %v605 = vshrl.u32 %v604, 7
    %v606 = vsub.s32 1, %v605
    %v607 = vrot.slane %v597, %v606
    %v608 = vmul.f32 %v468, %v607
    %v609 = vmul.f32 %v469, %v607
    %v610 = vmul.f32 %v470, %v607
    %v611 = vmul.f32 %v471, %v607
    %v613 = vlaneseq
    %v614 = vshrl.u32 %v613, 7
    %v615 = vsub.s32 0, %v614
    %v616 = vrot.slane %v603, %v615
    %v618 = vadd.f32 %v608, %v616
    %v619 = vadd.f32 %v609, %v616
    %v620 = vadd.f32 %v610, %v616
    %v621 = vadd.f32 %v611, %v616
    %v622 = vmul.f32 %v618, 0.01
    %v623 = vmul.f32 %v619, 0.01
    %v624 = vmul.f32 %v620, 0.01
    %v625 = vmul.f32 %v621, 0.01
    %v626 = vmax.f32 %v618, %v622
    %v627 = vmax.f32 %v619, %v623
    %v628 = vmax.f32 %v620, %v624
    %v629 = vmax.f32 %v621, %v625
    %v630 = vrot.slane %v626, 7
    %v631 = vrot.slane %v627, 7
    %v632 = vrot.slane %v628, 7
    %v633 = vrot.slane %v629, 7
    %v634 = vsel %vm112, %v632, %v633
    %v635 = vsel %vm112, %v631, %v632
    %v636 = vsel %vm112, %v630, %v631
    %v637 = vsel %vm112, %v633, %v630
    %v638 = vsel %vm121, 0.0, %v637
    %v639 = vsel %vm122, 0.0, %v636
    %v640 = vsel %vm123, 0.0, %v635
    %v641 = vsel %vm124, 0.0, %v634
    %v642 = vrot.slane %v626, 1
    %v643 = vrot.slane %v627, 1
    %v644 = vrot.slane %v628, 1
    %v645 = vrot.slane %v629, 1
    %v646 = vsel %vm133, %v644, %v645
    %v647 = vsel %vm133, %v643, %v644
    %v648 = vsel %vm133, %v642, %v643
    %v649 = vsel %vm133, %v645, %v642
    %v650 = vsel %vm142, 0.0, %v648
    %v651 = vsel %vm143, 0.0, %v647
    %v652 = vsel %vm144, 0.0, %v646
    %v653 = vsel %vm145, 0.0, %v649
    %v654 = vld [vmem:[%s2] sm:$0xff]
    %v655 = vld [vmem:[%s2 + $0x8] sm:$0xff]
    %v656 = vld [vmem:[%s2 + $0x10] sm:$0xff]
    %v657 = vld [vmem:[%s2 + $0x18] sm:$0xff]
    %v658 = vld [vmem:[%s2 + $0x20] sm:$0xff]
    %v659 = vld [vmem:[%s2 + $0x28] sm:$0xff]
    %v660 = vld [vmem:[%s2 + $0x30] sm:$0xff]
    %v661 = vld [vmem:[%s2 + $0x38] sm:$0xff]
    %v662 = vld [vmem:[%s2 + $0x40] sm:$0xff]
    %v663 = vld [vmem:[%s2 + $0x48] sm:$0xff]
    %v664 = vld [vmem:[%s2 + $0x50] sm:$0xff]
    %v665 = vld [vmem:[%s2 + $0x58] sm:$0xff]
    %v666 = vld [vmem:[%s2 + $0x60] sm:$0xff]
    %v667 = vld [vmem:[%s2 + $0x68] sm:$0xff]
    %v668 = vld [vmem:[%s2 + $0x70] sm:$0xff]
    %v669 = vld [vmem:[%s2 + $0x78] sm:$0xff]
    %s670 = scalar_lea.vmem %s2, 128
    %v671 = vld [vmem:[%s670] sm:$0xff]
    %v672 = vld [vmem:[%s670 + $0x8] sm:$0xff]
    %v673 = vld [vmem:[%s670 + $0x10] sm:$0xff]
    %v674 = vld [vmem:[%s670 + $0x18] sm:$0xff]
    %v675 = vld [vmem:[%s670 + $0x20] sm:$0xff]
    %v676 = vld [vmem:[%s670 + $0x28] sm:$0xff]
    %v677 = vld [vmem:[%s670 + $0x30] sm:$0xff]
    %v678 = vld [vmem:[%s670 + $0x38] sm:$0xff]
    %v679 = vld [vmem:[%s670 + $0x40] sm:$0xff]
    %v680 = vld [vmem:[%s670 + $0x48] sm:$0xff]
    %v681 = vld [vmem:[%s670 + $0x50] sm:$0xff]
    %v682 = vld [vmem:[%s670 + $0x58] sm:$0xff]
    %v683 = vld [vmem:[%s670 + $0x60] sm:$0xff]
    %v684 = vld [vmem:[%s670 + $0x68] sm:$0xff]
    %v685 = vld [vmem:[%s670 + $0x70] sm:$0xff]
    %v686 = vld [vmem:[%s670 + $0x78] sm:$0xff]
    %687 = vmatprep.subr.mxu0 0.0
    %688 = vmatpush1.msra.mxu0 %v671
    %689 = vmatprep.subr.mxu0 0.0
    %690 = vmatpush1.msra.mxu0 %v672
    %691 = vmatprep.subr.mxu0 0.0
    %692 = vmatpush1.msra.mxu0 %v673
    %693 = vmatprep.subr.mxu0 0.0
    %694 = vmatpush1.msra.mxu0 %v674
    %695 = vmatprep.subr.mxu0 0.0
    %696 = vmatpush1.msra.mxu0 %v675
    %697 = vmatprep.subr.mxu0 0.0
    %698 = vmatpush1.msra.mxu0 %v676
    %699 = vmatprep.subr.mxu0 0.0
    %700 = vmatpush1.msra.mxu0 %v677
    %701 = vmatprep.subr.mxu0 0.0
    %702 = vmatpush1.msra.mxu0 %v678
    %703 = vmatprep.subr.mxu0 0.0
    %704 = vmatpush1.msra.mxu0 %v679
    %705 = vmatprep.subr.mxu0 0.0
    %706 = vmatpush1.msra.mxu0 %v680
    %707 = vmatprep.subr.mxu0 0.0
    %708 = vmatpush1.msra.mxu0 %v681
    %709 = vmatprep.subr.mxu0 0.0
    %710 = vmatpush1.msra.mxu0 %v682
    %711 = vmatprep.subr.mxu0 0.0
    %712 = vmatpush1.msra.mxu0 %v683
    %713 = vmatprep.subr.mxu0 0.0
    %714 = vmatpush1.msra.mxu0 %v684
    %715 = vmatprep.subr.mxu0 0.0
    %716 = vmatpush1.msra.mxu0 %v685
    %717 = vmatprep.subr.mxu0 0.0
    %718 = vmatpush1.msra.mxu0 %v686
    %719 = vmatprep.subr.mxu0 0.0
    %720 = vmatpush1.msra.mxu0 0.0
    %721 = vmatprep.subr.mxu0 0.0
    %722 = vmatpush1.msra.mxu0 0.0
    %723 = vmatprep.subr.mxu0 0.0
    %724 = vmatpush1.msra.mxu0 0.0
    %725 = vmatprep.subr.mxu0 0.0
    %726 = vmatpush1.msra.mxu0 0.0
    %727 = vmatprep.subr.mxu0 0.0
    %728 = vmatpush1.msra.mxu0 0.0
    %729 = vmatprep.subr.mxu0 0.0
    %730 = vmatpush1.msra.mxu0 0.0
    %731 = vmatprep.subr.mxu0 0.0
    %732 = vmatpush1.msra.mxu0 0.0
    %733 = vmatprep.subr.mxu0 0.0
    %734 = vmatpush1.msra.mxu0 0.0
    %735 = vmatprep.subr.mxu0 0.0
    %736 = vmatpush1.msra.mxu0 0.0
    %737 = vmatprep.subr.mxu0 0.0
    %738 = vmatpush1.msra.mxu0 0.0
    %739 = vmatprep.subr.mxu0 0.0
    %740 = vmatpush1.msra.mxu0 0.0
    %741 = vmatprep.subr.mxu0 0.0
    %742 = vmatpush1.msra.mxu0 0.0
    %743 = vmatprep.subr.mxu0 0.0
    %744 = vmatpush1.msra.mxu0 0.0
    %745 = vmatprep.subr.mxu0 0.0
    %746 = vmatpush1.msra.mxu0 0.0
    %747 = vmatprep.subr.mxu0 0.0
    %748 = vmatpush1.msra.mxu0 0.0
    %749 = vmatprep.subr.mxu0 0.0
    %750 = vmatpush1.msra.mxu0 0.0
    %751 = vmatprep.mubr.f32.mxu0 0.0
    %752 = vmatmul.mubr.f32.gmra.mrb[0].mxu0 %v626
    %v753 = vpop.f32.mrb[0].mxu0
    %v754 = vadd.f32 0.0, %v753
    %v755 = vpop.f32.mrb[0].mxu0
    %756 = vmatprep.mubr.f32.mxu0 0.0
    %757 = vmatmul.mubr.f32.gmra.mrb[0].mxu0 %v627
    %v758 = vpop.f32.mrb[0].mxu0
    %v759 = vadd.f32 0.0, %v758
    %v760 = vpop.f32.mrb[0].mxu0
    %761 = vmatprep.mubr.f32.mxu0 0.0
    %762 = vmatmul.mubr.f32.gmra.mrb[0].mxu0 %v628
    %v763 = vpop.f32.mrb[0].mxu0
    %v764 = vadd.f32 0.0, %v763
    %v765 = vpop.f32.mrb[0].mxu0
    %766 = vmatprep.mubr.f32.mxu0 0.0
    %767 = vmatmul.mubr.f32.gmra.mrb[0].mxu0 %v629
    %v768 = vpop.f32.mrb[0].mxu0
    %v769 = vadd.f32 0.0, %v768
    %v770 = vpop.f32.mrb[0].mxu0
    %771 = vdwg.mxu0
    %772 = vmatprep.subr.mxu0 0.0
    %773 = vmatpush1.msra.mxu0 %v654
    %774 = vmatprep.subr.mxu0 0.0
    %775 = vmatpush1.msra.mxu0 %v655
    %776 = vmatprep.subr.mxu0 0.0
    %777 = vmatpush1.msra.mxu0 %v656
    %778 = vmatprep.subr.mxu0 0.0
    %779 = vmatpush1.msra.mxu0 %v657
    %780 = vmatprep.subr.mxu0 0.0
    %781 = vmatpush1.msra.mxu0 %v658
    %782 = vmatprep.subr.mxu0 0.0
    %783 = vmatpush1.msra.mxu0 %v659
    %784 = vmatprep.subr.mxu0 0.0
    %785 = vmatpush1.msra.mxu0 %v660
    %786 = vmatprep.subr.mxu0 0.0
    %787 = vmatpush1.msra.mxu0 %v661
    %788 = vmatprep.subr.mxu0 0.0
    %789 = vmatpush1.msra.mxu0 %v662
    %790 = vmatprep.subr.mxu0 0.0
    %791 = vmatpush1.msra.mxu0 %v663
    %792 = vmatprep.subr.mxu0 0.0
    %793 = vmatpush1.msra.mxu0 %v664
    %794 = vmatprep.subr.mxu0 0.0
    %795 = vmatpush1.msra.mxu0 %v665
    %796 = vmatprep.subr.mxu0 0.0
    %797 = vmatpush1.msra.mxu0 %v666
    %798 = vmatprep.subr.mxu0 0.0
    %799 = vmatpush1.msra.mxu0 %v667
    %800 = vmatprep.subr.mxu0 0.0
    %801 = vmatpush1.msra.mxu0 %v668
    %802 = vmatprep.subr.mxu0 0.0
    %803 = vmatpush1.msra.mxu0 %v669
    %804 = vmatprep.subr.mxu0 0.0
    %805 = vmatpush1.msra.mxu0 0.0
    %806 = vmatprep.subr.mxu0 0.0
    %807 = vmatpush1.msra.mxu0 0.0
    %808 = vmatprep.subr.mxu0 0.0
    %809 = vmatpush1.msra.mxu0 0.0
    %810 = vmatprep.subr.mxu0 0.0
    %811 = vmatpush1.msra.mxu0 0.0
    %812 = vmatprep.subr.mxu0 0.0
    %813 = vmatpush1.msra.mxu0 0.0
    %814 = vmatprep.subr.mxu0 0.0
    %815 = vmatpush1.msra.mxu0 0.0
    %816 = vmatprep.subr.mxu0 0.0
    %817 = vmatpush1.msra.mxu0 0.0
    %818 = vmatprep.subr.mxu0 0.0
    %819 = vmatpush1.msra.mxu0 0.0
    %820 = vmatprep.subr.mxu0 0.0
    %821 = vmatpush1.msra.mxu0 0.0
    %822 = vmatprep.subr.mxu0 0.0
    %823 = vmatpush1.msra.mxu0 0.0
    %824 = vmatprep.subr.mxu0 0.0
    %825 = vmatpush1.msra.mxu0 0.0
    %826 = vmatprep.subr.mxu0 0.0
    %827 = vmatpush1.msra.mxu0 0.0
    %828 = vmatprep.subr.mxu0 0.0
    %829 = vmatpush1.msra.mxu0 0.0
    %830 = vmatprep.subr.mxu0 0.0
    %831 = vmatpush1.msra.mxu0 0.0
    %832 = vmatprep.subr.mxu0 0.0
    %833 = vmatpush1.msra.mxu0 0.0
    %834 = vmatprep.subr.mxu0 0.0
    %835 = vmatpush1.msra.mxu0 0.0
    %836 = vmatprep.mubr.f32.mxu0 0.0
    %837 = vmatmul.mubr.f32.gmra.mrb[0].mxu0 %v638
    %v838 = vpop.f32.mrb[0].mxu0
    %v839 = vadd.f32 %v754, %v838
    %v840 = vpop.f32.mrb[0].mxu0
    %841 = vmatprep.mubr.f32.mxu0 0.0
    %842 = vmatmul.mubr.f32.gmra.mrb[0].mxu0 %v639
    %v843 = vpop.f32.mrb[0].mxu0
    %v844 = vadd.f32 %v759, %v843
    %v845 = vpop.f32.mrb[0].mxu0
    %846 = vmatprep.mubr.f32.mxu0 0.0
    %847 = vmatmul.mubr.f32.gmra.mrb[0].mxu0 %v640
    %v848 = vpop.f32.mrb[0].mxu0
    %v849 = vadd.f32 %v764, %v848
    %v850 = vpop.f32.mrb[0].mxu0
    %851 = vmatprep.mubr.f32.mxu0 0.0
    %852 = vmatmul.mubr.f32.gmra.mrb[0].mxu0 %v641
    %v853 = vpop.f32.mrb[0].mxu0
    %v854 = vadd.f32 %v769, %v853
    %v855 = vpop.f32.mrb[0].mxu0
    %856 = vdwg.mxu0
    %s857 = scalar_lea.vmem %s2, 256
    %v858 = vld [vmem:[%s857] sm:$0xff]
    %v859 = vld [vmem:[%s857 + $0x8] sm:$0xff]
    %v860 = vld [vmem:[%s857 + $0x10] sm:$0xff]
    %v861 = vld [vmem:[%s857 + $0x18] sm:$0xff]
    %v862 = vld [vmem:[%s857 + $0x20] sm:$0xff]
    %v863 = vld [vmem:[%s857 + $0x28] sm:$0xff]
    %v864 = vld [vmem:[%s857 + $0x30] sm:$0xff]
    %v865 = vld [vmem:[%s857 + $0x38] sm:$0xff]
    %v866 = vld [vmem:[%s857 + $0x40] sm:$0xff]
    %v867 = vld [vmem:[%s857 + $0x48] sm:$0xff]
    %v868 = vld [vmem:[%s857 + $0x50] sm:$0xff]
    %v869 = vld [vmem:[%s857 + $0x58] sm:$0xff]
    %v870 = vld [vmem:[%s857 + $0x60] sm:$0xff]
    %v871 = vld [vmem:[%s857 + $0x68] sm:$0xff]
    %v872 = vld [vmem:[%s857 + $0x70] sm:$0xff]
    %v873 = vld [vmem:[%s857 + $0x78] sm:$0xff]
    %874 = vmatprep.subr.mxu0 0.0
    %875 = vmatpush1.msra.mxu0 %v858
    %876 = vmatprep.subr.mxu0 0.0
    %877 = vmatpush1.msra.mxu0 %v859
    %878 = vmatprep.subr.mxu0 0.0
    %879 = vmatpush1.msra.mxu0 %v860
    %880 = vmatprep.subr.mxu0 0.0
    %881 = vmatpush1.msra.mxu0 %v861
    %882 = vmatprep.subr.mxu0 0.0
    %883 = vmatpush1.msra.mxu0 %v862
    %884 = vmatprep.subr.mxu0 0.0
    %885 = vmatpush1.msra.mxu0 %v863
    %886 = vmatprep.subr.mxu0 0.0
    %887 = vmatpush1.msra.mxu0 %v864
    %888 = vmatprep.subr.mxu0 0.0
    %889 = vmatpush1.msra.mxu0 %v865
    %890 = vmatprep.subr.mxu0 0.0
    %891 = vmatpush1.msra.mxu0 %v866
    %892 = vmatprep.subr.mxu0 0.0
    %893 = vmatpush1.msra.mxu0 %v867
    %894 = vmatprep.subr.mxu0 0.0
    %895 = vmatpush1.msra.mxu0 %v868
    %896 = vmatprep.subr.mxu0 0.0
    %897 = vmatpush1.msra.mxu0 %v869
    %898 = vmatprep.subr.mxu0 0.0
    %899 = vmatpush1.msra.mxu0 %v870
    %900 = vmatprep.subr.mxu0 0.0
    %901 = vmatpush1.msra.mxu0 %v871
    %902 = vmatprep.subr.mxu0 0.0
    %903 = vmatpush1.msra.mxu0 %v872
    %904 = vmatprep.subr.mxu0 0.0
    %905 = vmatpush1.msra.mxu0 %v873
    %906 = vmatprep.subr.mxu0 0.0
    %907 = vmatpush1.msra.mxu0 0.0
    %908 = vmatprep.subr.mxu0 0.0
    %909 = vmatpush1.msra.mxu0 0.0
    %910 = vmatprep.subr.mxu0 0.0
    %911 = vmatpush1.msra.mxu0 0.0
    %912 = vmatprep.subr.mxu0 0.0
    %913 = vmatpush1.msra.mxu0 0.0
    %914 = vmatprep.subr.mxu0 0.0
    %915 = vmatpush1.msra.mxu0 0.0
    %916 = vmatprep.subr.mxu0 0.0
    %917 = vmatpush1.msra.mxu0 0.0
    %918 = vmatprep.subr.mxu0 0.0
    %919 = vmatpush1.msra.mxu0 0.0
    %920 = vmatprep.subr.mxu0 0.0
    %921 = vmatpush1.msra.mxu0 0.0
    %922 = vmatprep.subr.mxu0 0.0
    %923 = vmatpush1.msra.mxu0 0.0
    %924 = vmatprep.subr.mxu0 0.0
    %925 = vmatpush1.msra.mxu0 0.0
    %926 = vmatprep.subr.mxu0 0.0
    %927 = vmatpush1.msra.mxu0 0.0
    %928 = vmatprep.subr.mxu0 0.0
    %929 = vmatpush1.msra.mxu0 0.0
    %930 = vmatprep.subr.mxu0 0.0
    %931 = vmatpush1.msra.mxu0 0.0
    %932 = vmatprep.subr.mxu0 0.0
    %933 = vmatpush1.msra.mxu0 0.0
    %934 = vmatprep.subr.mxu0 0.0
    %935 = vmatpush1.msra.mxu0 0.0
    %936 = vmatprep.subr.mxu0 0.0
    %937 = vmatpush1.msra.mxu0 0.0
    %938 = vmatprep.mubr.f32.mxu0 0.0
    %939 = vmatmul.mubr.f32.gmra.mrb[0].mxu0 %v650
    %v940 = vpop.f32.mrb[0].mxu0
    %v941 = vadd.f32 0.0, %v940
    %v942 = vpop.f32.mrb[0].mxu0
    %943 = vmatprep.mubr.f32.mxu0 0.0
    %944 = vmatmul.mubr.f32.gmra.mrb[0].mxu0 %v651
    %v945 = vpop.f32.mrb[0].mxu0
    %v946 = vadd.f32 0.0, %v945
    %v947 = vpop.f32.mrb[0].mxu0
    %948 = vmatprep.mubr.f32.mxu0 0.0
    %949 = vmatmul.mubr.f32.gmra.mrb[0].mxu0 %v652
    %v950 = vpop.f32.mrb[0].mxu0
    %v951 = vadd.f32 0.0, %v950
    %v952 = vpop.f32.mrb[0].mxu0
    %953 = vmatprep.mubr.f32.mxu0 0.0
    %954 = vmatmul.mubr.f32.gmra.mrb[0].mxu0 %v653
    %v955 = vpop.f32.mrb[0].mxu0
    %v956 = vadd.f32 0.0, %v955
    %v957 = vpop.f32.mrb[0].mxu0
    %958 = vdwg.mxu0
    %v959 = vadd.f32 %v839, %v941
    %v960 = vadd.f32 %v844, %v946
    %v961 = vadd.f32 %v849, %v951
    %v962 = vadd.f32 %v854, %v956
    %v963 = vadd.f32 %v959, %v960
    %v964 = vadd.f32 %v963, %v961
    %v965 = vadd.f32 %v964, %v962
    %v966 = vrot.slane %v965, 4
    %v967 = vadd.f32 %v965, %v966
    %v968 = vrot.slane %v967, 2
    %v969 = vadd.f32 %v967, %v968
    %v970 = vrot.slane %v969, 1
    %v971 = vadd.f32 %v969, %v970
    %v972 = vmul.f32 %v959, %v959
    %v973 = vmul.f32 %v960, %v960
    %v974 = vmul.f32 %v961, %v961
    %v975 = vmul.f32 %v962, %v962
    %v976 = vadd.f32 %v972, %v973
    %v977 = vadd.f32 %v976, %v974
    %v978 = vadd.f32 %v977, %v975
    %v979 = vrot.slane %v978, 4
    %v980 = vadd.f32 %v978, %v979
    %v981 = vrot.slane %v980, 2
    %v982 = vadd.f32 %v980, %v981
    %v983 = vrot.slane %v982, 1
    %v984 = vadd.f32 %v982, %v983
    %v985 = vsel %vm494, %v971, %v984
    %986 = vmatprep.subr.mxu0 0.0
    %987 = vmatpush1.msra.mxu0 %v496
    %988 = vmatprep.subr.mxu0 0.0
    %989 = vmatpush1.msra.mxu0 %v497
    %990 = vmatprep.subr.mxu0 0.0
    %991 = vmatpush1.msra.mxu0 %v498
    %992 = vmatprep.subr.mxu0 0.0
    %993 = vmatpush1.msra.mxu0 %v499
    %994 = vmatprep.subr.mxu0 0.0
    %995 = vmatpush1.msra.mxu0 %v500
    %996 = vmatprep.subr.mxu0 0.0
    %997 = vmatpush1.msra.mxu0 %v501
    %998 = vmatprep.subr.mxu0 0.0
    %999 = vmatpush1.msra.mxu0 %v502
    %1000 = vmatprep.subr.mxu0 0.0
    %1001 = vmatpush1.msra.mxu0 %v503
    %1002 = vmatprep.subr.mxu0 0.0
    %1003 = vmatpush1.msra.mxu0 %v504
    %1004 = vmatprep.subr.mxu0 0.0
    %1005 = vmatpush1.msra.mxu0 %v505
    %1006 = vmatprep.subr.mxu0 0.0
    %1007 = vmatpush1.msra.mxu0 %v506
    %1008 = vmatprep.subr.mxu0 0.0
    %1009 = vmatpush1.msra.mxu0 %v507
    %1010 = vmatprep.subr.mxu0 0.0
    %1011 = vmatpush1.msra.mxu0 %v508
    %1012 = vmatprep.subr.mxu0 0.0
    %1013 = vmatpush1.msra.mxu0 %v509
    %1014 = vmatprep.subr.mxu0 0.0
    %1015 = vmatpush1.msra.mxu0 %v510
    %1016 = vmatprep.subr.mxu0 0.0
    %1017 = vmatpush1.msra.mxu0 %v511
    %1018 = vmatprep.subr.mxu0 0.0
    %1019 = vmatpush1.msra.mxu0 0.0
    %1020 = vmatprep.subr.mxu0 0.0
    %1021 = vmatpush1.msra.mxu0 0.0
    %1022 = vmatprep.subr.mxu0 0.0
    %1023 = vmatpush1.msra.mxu0 0.0
    %1024 = vmatprep.subr.mxu0 0.0
    %1025 = vmatpush1.msra.mxu0 0.0
    %1026 = vmatprep.subr.mxu0 0.0
    %1027 = vmatpush1.msra.mxu0 0.0
    %1028 = vmatprep.subr.mxu0 0.0
    %1029 = vmatpush1.msra.mxu0 0.0
    %1030 = vmatprep.subr.mxu0 0.0
    %1031 = vmatpush1.msra.mxu0 0.0
    %1032 = vmatprep.subr.mxu0 0.0
    %1033 = vmatpush1.msra.mxu0 0.0
    %1034 = vmatprep.subr.mxu0 0.0
    %1035 = vmatpush1.msra.mxu0 0.0
    %1036 = vmatprep.subr.mxu0 0.0
    %1037 = vmatpush1.msra.mxu0 0.0
    %1038 = vmatprep.subr.mxu0 0.0
    %1039 = vmatpush1.msra.mxu0 0.0
    %1040 = vmatprep.subr.mxu0 0.0
    %1041 = vmatpush1.msra.mxu0 0.0
    %1042 = vmatprep.subr.mxu0 0.0
    %1043 = vmatpush1.msra.mxu0 0.0
    %1044 = vmatprep.subr.mxu0 0.0
    %1045 = vmatpush1.msra.mxu0 0.0
    %1046 = vmatprep.subr.mxu0 0.0
    %1047 = vmatpush1.msra.mxu0 0.0
    %1048 = vmatprep.subr.mxu0 0.0
    %1049 = vmatpush1.msra.mxu0 0.0
    %1050 = vmatprep.mubr.f32.mxu0 0.0
    %1051 = vmatmul.mubr.f32.gmra.mrb[0].mxu0 %v985
    %v1052 = vpop.f32.mrb[0].mxu0
    %v1053 = vadd.f32 0.0, %v1052
    %v1054 = vpop.f32.mrb[0].mxu0
    %1055 = vdwg.mxu0
    %v1056 = vmul.f32 %v1053, 0.001953125
    %v1057 = vmul.f32 %v1056, %v1056
    %v1059 = vrot.slane %v1057, 7
    %v1061 = vsub.f32 %v1056, %v1059
    %v1062 = vadd.f32 %v1061, 1e-05
    %v1063 = vrsqrt.pop %v1062
    %v1064 = vld [vmem:[%s5] sm:$0x1]
    %v1066 = vlaneseq
    %v1067 = vshrl.u32 %v1066, 7
    %v1068 = vsub.s32 0, %v1067
    %v1069 = vrot.slane %v1064, %v1068
    %v1071 = vmul.f32 %v1063, %v1069
    %v1072 = vld [vmem:[%s6] sm:$0x1]
    %v1074 = vrot.slane %v1071, 1
    %v1076 = vmul.f32 %v1056, %v1074
    %v1077 = vsub.f32 %v1072, %v1076
    %v1078 = vlaneseq
    %v1079 = vshrl.u32 %v1078, 7
    %v1080 = vsub.s32 1, %v1079
    %v1081 = vrot.slane %v1071, %v1080
    %v1082 = vmul.f32 %v959, %v1081
    %v1083 = vmul.f32 %v960, %v1081
    %v1084 = vmul.f32 %v961, %v1081
    %v1085 = vmul.f32 %v962, %v1081
    %v1087 = vlaneseq
    %v1088 = vshrl.u32 %v1087, 7
    %v1089 = vsub.s32 0, %v1088
    %v1090 = vrot.slane %v1077, %v1089
    %v1092 = vadd.f32 %v1082, %v1090
    %v1093 = vadd.f32 %v1083, %v1090
    %v1094 = vadd.f32 %v1084, %v1090
    %v1095 = vadd.f32 %v1085, %v1090
    %v1096 = vmul.f32 %v1092, 0.01
    %v1097 = vmul.f32 %v1093, 0.01
    %v1098 = vmul.f32 %v1094, 0.01
    %v1099 = vmul.f32 %v1095, 0.01
    %v1100 = vmax.f32 %v1092, %v1096
    %v1101 = vmax.f32 %v1093, %v1097
    %v1102 = vmax.f32 %v1094, %v1098
    %v1103 = vmax.f32 %v1095, %v1099
    %1104 = vst [vmem:[%s8] sm:$0xff] %v1100
    %1105 = vst [vmem:[%s8 + $0x8] sm:$0xff] %v1101
    %1106 = vst [vmem:[%s8 + $0x10] sm:$0xff] %v1102
    %1107 = vst [vmem:[%s8 + $0x18] sm:$0xff] %v1103
    // Predicated region
    $region38: #{double_convolutional.1} parent=1 // pred_check
      _
    $region39: #{double_convolutional.1} parent=1 // pred_check_branch
      %1109 = sbr.rel (0) target = $region41
    $region40: #{double_convolutional.1} parent=1 // pred_region
      _
    $region41: #{double_convolutional.1} parent=1 // pred_fallthru
      _
    // Predicated region
    $region42: #{double_convolutional.1} parent=1 // pred_check
      _
    $region43: #{double_convolutional.1} parent=1 // pred_check_branch
      %1111 = sbr.rel (0) target = $region45
    $region44: #{double_convolutional.1} parent=1 // pred_region
      _
    $region45: #{double_convolutional.1} parent=1 // pred_fallthru
      _
    %1112 = vsyncpa [#allocation3], 1

</llo_original>
